<compile_context>
chip_gen: v7x
topology: tpu7x:2x2x1
jax: 0.10.0
libtpu: 0.0.40
codegen_flags: <defaults>
</compile_context>

<pallas_src>
import jax
import jax.numpy as jnp
from jax.experimental import pallas as pl
from jax.experimental.pallas import tpu as pltpu


def _round_up(x, m):
    return (x + m - 1) // m * m


def _sublane_tile(itemsize):
    # 32-bit dtypes pack 8 rows per (sublane, lane) tile, 16-bit 16, 8-bit 32.
    return max(8, 32 // itemsize)


def fusion_kernel(ip_ref, emb_ref, out_ref):
    # ip_ref : (bt, C,   thw)  VMEM
    # emb_ref: (bt, E,   1)    VMEM (E on sublanes, single lane)
    # out_ref: (bt, C+E, thw)  VMEM
    bt, C, thw = ip_ref.shape
    E = emb_ref.shape[1]
    sub = _sublane_tile(jnp.dtype(out_ref.dtype).itemsize)

    # Cast once on the tiny (bt, E, 1) column, then splat across the lane
    # (H*W) axis: pure VPU lane-broadcast, no cross-lane relayout.
    emb_col = emb_ref[...].astype(out_ref.dtype)
    emb_blk = jnp.broadcast_to(emb_col, (bt, E, thw))

    if C % sub == 0:
        # Channel boundary is sublane-tile aligned: two unmasked block stores.
        out_ref[:, :C, :] = ip_ref[...]
        out_ref[:, C:, :] = emb_blk
    else:
        # Misaligned boundary (e.g. C=4, f32): build the full output block
        # in-register and do a single aligned store, avoiding masked vst +
        # cross-sublane relayout at offset C on every grid step.
        out_ref[...] = jnp.concatenate([ip_ref[...], emb_blk], axis=1)


def _pick_tiles(B, C, E, HW_pad, itemsize, budget_bytes=12 << 20):
    """Pick (batch_tile, lane_tile) so the double-buffered per-step footprint
    (padding-aware) stays under `budget_bytes`, lane tiles are multiples of
    128, and the grid keeps >= 4 steps when the problem allows it."""
    sub = _sublane_tile(itemsize)
    c_pad = _round_up(C, sub)
    ce_pad = _round_up(C + E, sub)
    e_pad = _round_up(E, sub)

    def step_bytes(bt, thw):
        ip_blk = bt * c_pad * thw * itemsize
        out_blk = bt * ce_pad * thw * itemsize
        emb_blk = bt * e_pad * 128 * itemsize  # (bt, E, 1) lane-pads to 128
        return 2 * (ip_blk + out_blk + emb_blk)  # double-buffered

    # 1) Lane tile: largest multiple-of-128 divisor of HW_pad that fits the
    #    budget at bt=1, capped at 4096 lanes.
    thw = 128
    t = min(HW_pad, 4096)
    while t >= 128:
        if HW_pad % t == 0 and t % 128 == 0 and step_bytes(1, t) <= budget_bytes:
            thw = t
            break
        t -= 128

    # 2) Batch tile: largest divisor of B still inside the budget.
    bt = 1
    for cand in range(1, B + 1):
        if B % cand == 0 and step_bytes(cand, thw) <= budget_bytes:
            bt = cand

    # 3) Keep >= 4 total grid steps (>= 2 per TensorCore on v7x) when shapes
    #    allow; shrink the lane tile first, then the batch tile.
    def n_steps(bt_, thw_):
        return (B // bt_) * (HW_pad // thw_)

    while n_steps(bt, thw) < 4 and thw >= 256 and thw % 256 == 0:
        thw //= 2
    while n_steps(bt, thw) < 4 and bt > 1:
        bt = max(d for d in range(1, bt) if B % d == 0)
    return bt, thw


def fusion_layer(ip, emb):
    """Pallas implementation of FusionLayer.forward((ip, emb))."""
    B, C, H, W = ip.shape
    Be, E = emb.shape
    assert B == Be, "batch mismatch between ip and emb"

    out_dtype = ip.dtype  # torch.cat needs matching dtypes; emb is cast to ip's.
    itemsize = jnp.dtype(out_dtype).itemsize

    HW = H * W
    HW_pad = _round_up(HW, 128)  # lane-dense stores even for e.g. 14x14 stages

    # Free reshape (trailing H, W contiguous in NCHW) -> lane-dense layout.
    ip_flat = ip.reshape(B, C, HW)
    if HW_pad != HW:
        ip_flat = jnp.pad(ip_flat, ((0, 0), (0, 0), (0, HW_pad - HW)))
    emb_col = emb.astype(out_dtype)[:, :, None]  # (B, E, 1): E on sublanes

    bt, thw = _pick_tiles(B, C, E, HW_pad, itemsize)
    grid = (B // bt, HW_pad // thw)

    bytes_accessed = (
        ip_flat.size * itemsize
        + emb.size * jnp.dtype(emb.dtype).itemsize
        + B * (C + E) * HW_pad * itemsize
    )

    out_flat = pl.pallas_call(
        fusion_kernel,
        out_shape=jax.ShapeDtypeStruct((B, C + E, HW_pad), out_dtype),
        grid_spec=pltpu.PrefetchScalarGridSpec(
            num_scalar_prefetch=0,
            grid=grid,
            in_specs=[
                pl.BlockSpec((bt, C, thw), lambda b, s: (b, 0, s)),
                pl.BlockSpec((bt, E, 1), lambda b, s: (b, 0, 0)),
            ],
            out_specs=pl.BlockSpec((bt, C + E, thw), lambda b, s: (b, 0, s)),
        ),
        compiler_params=pltpu.CompilerParams(
            dimension_semantics=("parallel", "parallel"),
            vmem_limit_bytes=40 << 20,  # < v7x 64 MiB physical; ample headroom
        ),
        cost_estimate=pl.CostEstimate(
            flops=0, transcendentals=0, bytes_accessed=int(bytes_accessed)
        ),
    )(ip_flat, emb_col)

    if HW_pad != HW:
        out_flat = out_flat[:, :, :HW]
    return out_flat.reshape(B, C + E, H, W)


if __name__ == "__main__":
    B, C, E, H, W = 2, 4, 8, 16, 16

    key = jax.random.PRNGKey(0)
    k_ip, k_emb = jax.random.split(key)
    ip = jax.random.normal(k_ip, (B, C, H, W), dtype=jnp.float32)
    emb = jax.random.normal(k_emb, (B, E), dtype=jnp.float32)

    out = fusion_layer(ip, emb)
    out = jax.block_until_ready(out)

    # Reference (plain JAX) check of the fused broadcast + concat.
    ref = jnp.concatenate(
        [ip, jnp.broadcast_to(emb[:, :, None, None], (B, E, H, W))], axis=1
    )
    assert out.shape == (B, C + E, H, W)
    assert jnp.allclose(out, ref), "mismatch vs reference"

    print("KERNEL_OK")
</pallas_src>

<mosaic_0001>
module attributes {stable_mosaic.version = 11 : i64} {
  func.func @fusion_kernel(%arg0: i32, %arg1: i32, %arg2: memref<1x4x128xf32, #tpu.memory_space<vmem>>, %arg3: memref<1x8x1xf32, #tpu.memory_space<vmem>>, %arg4: memref<1x12x128xf32, #tpu.memory_space<vmem>>) attributes {dimension_semantics = [#tpu.dimension_semantics<parallel>, #tpu.dimension_semantics<parallel>], iteration_bounds = array<i64: 2, 2>, scalar_prefetch = 0 : i64, scratch_operands = 0 : i64, tpu.core_type = #tpu.core_type<tc>, window_params = [{transform_indices = @transform_0, window_bounds = array<i64: 1, 4, 128>}, {transform_indices = @transform_1, window_bounds = array<i64: 1, 8, 1>}, {transform_indices = @transform_2, window_bounds = array<i64: 1, 12, 128>}]} {
    %c0 = arith.constant 0 : index
    %c0_0 = arith.constant 0 : index
    %c0_1 = arith.constant 0 : index
    %0 = vector.load %arg3[%c0, %c0_0, %c0_1] : memref<1x8x1xf32, #tpu.memory_space<vmem>>, vector<1x8x1xf32>
    %1 = vector.shape_cast %0 : vector<1x8x1xf32> to vector<1x8x1xf32>
    %2 = vector.broadcast %1 : vector<1x8x1xf32> to vector<1x8x128xf32>
    %c0_2 = arith.constant 0 : index
    %c0_3 = arith.constant 0 : index
    %c0_4 = arith.constant 0 : index
    %3 = vector.load %arg2[%c0_2, %c0_3, %c0_4] : memref<1x4x128xf32, #tpu.memory_space<vmem>>, vector<1x4x128xf32>
    %4 = tpu.concatenate %3, %2 in 1 : vector<1x4x128xf32>, vector<1x8x128xf32> -> vector<1x12x128xf32>
    %c0_5 = arith.constant 0 : index
    %c0_6 = arith.constant 0 : index
    %c0_7 = arith.constant 0 : index
    %5 = vector.load %arg4[%c0_5, %c0_6, %c0_7] : memref<1x12x128xf32, #tpu.memory_space<vmem>>, vector<1x12x128xf32>
    tpu.vector_store %arg4[%c0_5, %c0_6, %c0_7], %4 {strides = array<i32>} : memref<1x12x128xf32, #tpu.memory_space<vmem>>, vector<1x12x128xf32>,
    return
  }
  func.func @transform_0(%arg0: i32, %arg1: i32) -> (i32, i32, i32) {
    %c0_i32 = arith.constant 0 : i32
    %c0_i32_0 = arith.constant 0 : i32
    return %arg0, %c0_i32, %arg1 : i32, i32, i32
  }
  func.func @transform_1(%arg0: i32, %arg1: i32) -> (i32, i32, i32) {
    %c0_i32 = arith.constant 0 : i32
    %c0_i32_0 = arith.constant 0 : i32
    %c0_i32_1 = arith.constant 0 : i32
    return %arg0, %c0_i32, %c0_i32_0 : i32, i32, i32
  }
  func.func @transform_2(%arg0: i32, %arg1: i32) -> (i32, i32, i32) {
    %c0_i32 = arith.constant 0 : i32
    %c0_i32_0 = arith.constant 0 : i32
    return %arg0, %c0_i32, %arg1 : i32, i32, i32
  }
}

</mosaic_0001>

<llo_original>
// kernel: tpu_custom_call.1
$region0: #{tpu_custom_call.1}
  #allocation0 [shape = 'u32[]', space=smem, size = 0x4, offset = 0x4, fixed_abs, tag = 'smem constant byte address 0x4 - core index']
  #allocation1 [shape = 'u32[144,128]{1,0:T(1,128)}', space=vmem, size = 0x12000, scoped, tag = 'internal scratch']
  %s0 = inlined_call_operand.vmem [shape: f32[2,4,256], index: 0, kind: input, shape index: {}]
  %s1 = inlined_call_operand.vmem [shape: f32[2,8,1], index: 1, kind: input, shape index: {}]
  %s2 = inlined_call_operand.vmem [shape: f32[2,12,256], index: 2, kind: output, shape index: {}]
  %s3 = sld [smem:[#allocation0]]
  $region75: #{tpu_custom_call.1} parent=0
    _
  %s5 = ssub.s32 1, %s3
  %s6 = scalar_select 0, %s5, %s3
  $region1: #{tpu_custom_call.1} parent=0
    #allocation2 [shape = 'u8[16384]{0}', space=vmem, size = 0x4000, scoped, tag = 'output window, operand 0']
    loop: start=0, step=1, limit=6
    $region2: #{tpu_custom_call.1} parent=1 // loop_pre_header
      _
    $region3: #{tpu_custom_call.1} parent=1 // loop_header
      %s8 = sphi 0, %s12
      %p9 = scmp.ge.s32.totalorder %s8, 6
      %s15 = sphi 0, %s27
      %s16 = sphi 0, %s23
      %s17 = sphi 0, %s15
      %s18 = sphi 0, %s16
      %s19 = sphi 0, %s17
      %s20 = sphi 0, %s18
      %s32 = sphi 0, %s34
      %s35 = sphi 0, %s32
      %s36 = sphi 0, %s35
      %s52 = sphi 0, %s36
      %s58 = sphi 0, %s60
      %s61 = sphi 0, %s58
      %s62 = sphi 0, %s61
      %s78 = sphi 0, %s62
      %s86 = sphi 0, %s88
      %s89 = sphi 0, %s86
      %s90 = sphi 0, %s89
      %s106 = sphi 0, %s90
    $region4: #{tpu_custom_call.1} parent=1 // loop_header_branch
      %11 = sbr.rel (%p9) target = $region8
    $region5: #{tpu_custom_call.1} parent=1 // loop_body
      %s13 = ssub.s32 %s8, 1
      %s14 = ssub.s32 %s8, 2
      %s21 = sadd.s32 1, %s16
      %p22 = scmp.ge.s32.totalorder %s21, 2
      %s23 = scalar_select %p22, 0, %s21
      %s24 = sadd.s32 1, %s15
      %s25 = scalar_select %p22, %s24, %s15
      %p26 = scmp.ge.s32.totalorder %s25, 2
      %s27 = scalar_select %p26, 0, %s25
      %s28 = ssub.s32 %s15, %s27
      %s29 = ssub.s32 %s16, %s23
      %s30 = sor.u32 %s28, %s29
      %p31 = scmp.eq.s32.totalorder %s30, 0
      %s33 = sadd.s32 %s32, 1
      %s34 = scalar_select %p31, %s32, %s33
      %p37 = pneg %p31
      %p38 = scmp.eq.s32.totalorder %s8, 3
      %p39 = por %p37, %p38
      %p40 = scmp.ne.s32.totalorder %s32, %s35
      %p41 = scmp.eq.s32.totalorder %s8, 0
      %p42 = por %p40, %p41
      %p43 = scmp.ne.s32.totalorder %s32, %s35
      %p44 = scmp.eq.s32.totalorder %s13, 3
      %p45 = por %p43, %p44
      %p46 = scmp.ne.s32.totalorder %s35, %s36
      %p47 = scmp.eq.s32.totalorder %s13, 0
      %p48 = por %p46, %p47
      %p49 = scmp.ne.s32.totalorder %s35, %s36
      %p50 = scmp.eq.s32.totalorder %s14, 3
      %p51 = por %p49, %p50
      %p53 = scmp.ne.s32.totalorder %s36, %s52
      %p54 = scmp.eq.s32.totalorder %s14, 0
      %p55 = por %p53, %p54
      %s56 = ssub.s32 %s15, %s27
      %p57 = scmp.eq.s32.totalorder %s56, 0
      %s59 = sadd.s32 %s58, 1
      %s60 = scalar_select %p57, %s58, %s59
      %p63 = pneg %p57
      %p64 = scmp.eq.s32.totalorder %s8, 3
      %p65 = por %p63, %p64
      %p66 = scmp.ne.s32.totalorder %s58, %s61
      %p67 = scmp.eq.s32.totalorder %s8, 0
      %p68 = por %p66, %p67
      %p69 = scmp.ne.s32.totalorder %s58, %s61
      %p70 = scmp.eq.s32.totalorder %s13, 3
      %p71 = por %p69, %p70
      %p72 = scmp.ne.s32.totalorder %s61, %s62
      %p73 = scmp.eq.s32.totalorder %s13, 0
      %p74 = por %p72, %p73
      %p75 = scmp.ne.s32.totalorder %s61, %s62
      %p76 = scmp.eq.s32.totalorder %s14, 3
      %p77 = por %p75, %p76
      %p79 = scmp.ne.s32.totalorder %s62, %s78
      %p80 = scmp.eq.s32.totalorder %s14, 0
      %p81 = por %p79, %p80
      %s82 = ssub.s32 %s15, %s27
      %s83 = ssub.s32 %s16, %s23
      %s84 = sor.u32 %s82, %s83
      %p85 = scmp.eq.s32.totalorder %s84, 0
      %s87 = sadd.s32 %s86, 1
      %s88 = scalar_select %p85, %s86, %s87
      %p91 = pneg %p85
      %p92 = scmp.eq.s32.totalorder %s8, 3
      %p93 = por %p91, %p92
      %p94 = scmp.ne.s32.totalorder %s86, %s89
      %p95 = scmp.eq.s32.totalorder %s8, 0
      %p96 = por %p94, %p95
      %p97 = scmp.ne.s32.totalorder %s86, %s89
      %p98 = scmp.eq.s32.totalorder %s13, 3
      %p99 = por %p97, %p98
      %p100 = scmp.ne.s32.totalorder %s89, %s90
      %p101 = scmp.eq.s32.totalorder %s13, 0
      %p102 = por %p100, %p101
      %p103 = scmp.ne.s32.totalorder %s89, %s90
      %p104 = scmp.eq.s32.totalorder %s14, 3
      %p105 = por %p103, %p104
      %p107 = scmp.ne.s32.totalorder %s90, %s106
      %p108 = scmp.eq.s32.totalorder %s14, 0
      %p109 = por %p107, %p108
      %p110 = scmp.le.s32.totalorder 1, %s8
      %p111 = scmp.lt.s32.totalorder %s8, 5
      %p112 = pnand %p110, %p111
      %p113 = pneg %p112
      // Predicated region
      $region9: #{tpu_custom_call.1} parent=5 // pred_check
        _
      $region10: #{tpu_custom_call.1} parent=5 // pred_check_branch
        %115 = sbr.rel (%p112) target = $region12
      $region11: #{tpu_custom_call.1} parent=5 // pred_region
        %s116 = ssub.s32 %s8, 1
      $region12: #{tpu_custom_call.1} parent=5 // pred_fallthru
        _
      %p117 = scmp.lt.s32.totalorder %s8, 4
      // Predicated region
      $region13: #{tpu_custom_call.1} parent=5 // pred_check
        %p118 = pneg %p117
      $region14: #{tpu_custom_call.1} parent=5 // pred_check_branch
        %120 = sbr.rel (%p118) target = $region16
      $region15: #{tpu_custom_call.1} parent=5 // pred_region
        // Predicated region
        $region17: #{tpu_custom_call.1} parent=15 // pred_check
          %p121 = pneg %p42
        $region18: #{tpu_custom_call.1} parent=15 // pred_check_branch
          %123 = sbr.rel (%p121) target = $region20
        $region19: #{tpu_custom_call.1} parent=15 // pred_region
          %p124 = scmp.lt.s32.totalorder %s15, 1
          %s125 = scalar_select %p124, %s15, 1
          %p126 = scmp.lt.s32.totalorder %s16, 1
          %s127 = scalar_select %p126, %s16, 1
          %s128 = smul.addr %s125, 2
          %s129 = sadd.s32 %s127, %s128
          %s130 = smul.addr %s129, 4
          %s131 = scalar_lea.vmem %s0, %s130
        $region20: #{tpu_custom_call.1} parent=15 // pred_fallthru
          _
        // Predicated region
        $region21: #{tpu_custom_call.1} parent=15 // pred_check
          %p132 = pneg %p68
        $region22: #{tpu_custom_call.1} parent=15 // pred_check_branch
          %134 = sbr.rel (%p132) target = $region24
        $region23: #{tpu_custom_call.1} parent=15 // pred_region
          %p135 = scmp.lt.s32.totalorder %s15, 1
          %s136 = scalar_select %p135, %s15, 1
          %s137 = smul.addr %s136, 8
          %s138 = scalar_lea.vmem %s1, %s137
        $region24: #{tpu_custom_call.1} parent=15 // pred_fallthru
          _
      $region16: #{tpu_custom_call.1} parent=5 // pred_fallthru
        _
      %p139 = scmp.le.s32.totalorder 1, %s8
      %p140 = scmp.lt.s32.totalorder %s8, 5
      %p141 = pnand %p139, %p140
      %p142 = pneg %p141
      // Predicated region
      $region25: #{tpu_custom_call.1} parent=5 // pred_check
        _
      $region26: #{tpu_custom_call.1} parent=5 // pred_check_branch
        %144 = sbr.rel (%p141) target = $region28
      $region27: #{tpu_custom_call.1} parent=5 // pred_region
        %s145 = ssub.s32 %s8, 1
        %p146 = scmp.lt.s32.totalorder %s17, 1
        %s147 = scalar_select %p146, %s17, 1
        %p148 = scmp.lt.s32.totalorder %s18, 1
        %s149 = scalar_select %p148, %s18, 1
        %s150 = smul.addr %s147, 2
        %s151 = sadd.s32 %s149, %s150
        %s152 = smul.addr %s151, 4
        %s153 = scalar_lea.vmem %s0, %s152
        %p154 = pneg %p48
        %p155 = pneg %p45
        %p156 = scmp.lt.s32.totalorder %s17, 1
        %s157 = scalar_select %p156, %s17, 1
        %s158 = smul.addr %s157, 8
        %s159 = scalar_lea.vmem %s1, %s158
        %p160 = pneg %p74
        %p161 = pneg %p71
        %p162 = pneg %p102
        %p163 = pneg %p99
        %s164 = sand.u32 %s89, 1
        %s165 = sand.u32 %s89, 1
        %s166 = smul.addr %s165, 16
        %s167 = scalar_lea.vmem [#allocation2], %s166
        %p168 = scmp.lt.s32.totalorder %s17, 1
        %s169 = scalar_select %p168, %s17, 1
        %p170 = scmp.lt.s32.totalorder %s18, 1
        %s171 = scalar_select %p170, %s18, 1
        %s172 = smul.addr %s169, 2
        %s173 = sadd.s32 %s171, %s172
        %s174 = smul.addr %s173, 4
        %s175 = scalar_lea.vmem %s0, %s174
        %p176 = scmp.lt.s32.totalorder %s17, 1
        %s177 = scalar_select %p176, %s17, 1
        %s178 = smul.addr %s177, 8
        %s179 = scalar_lea.vmem %s1, %s178
        %v180 = vld [vmem:[%s179] sm:$0xff]
        %182 = vset.pattern.permute.xlu0 0
        %183 = vperm.xlu0 %182, %v180
        %v184 = vpop.permute.xlu0 %183
        %v185 = vld [vmem:[%s175] sm:$0xf]
        %v186 = vrot.slane %v184, 4
        %vm188 = vcmask 1043456
        %v189 = vsel %vm188, %v185, %v186
        %190 = vst [vmem:[%s167] sm:$0xff] %v189
        %191 = vst [vmem:[%s167 + $0x8] sm:$0xf] %v186
        %s192 = sand.u32 %s89, 1
        %s193 = sand.u32 %s89, 1
        %s194 = smul.addr %s193, 16
        %s195 = scalar_lea.vmem [#allocation2], %s194
        // Predicated region
        $region29: #{tpu_custom_call.1} parent=27 // pred_check
          %p196 = pneg %p99
        $region30: #{tpu_custom_call.1} parent=27 // pred_check_branch
          %198 = sbr.rel (%p196) target = $region32
        $region31: #{tpu_custom_call.1} parent=27 // pred_region
          %s199 = smul.addr %s17, 4
          %s200 = sadd.s32 %s18, %s199
          %s201 = smul.addr %s200, 8
          %s202 = scalar_lea.vmem %s2, %s201
          // Predicated region
          $region33: #{tpu_custom_call.1} parent=31 // pred_check
            _
          $region34: #{tpu_custom_call.1} parent=31 // pred_check_branch
            %204 = sbr.rel (0) target = $region36
          $region35: #{tpu_custom_call.1} parent=31 // pred_region
            // Predicated region
            $region37: #{tpu_custom_call.1} parent=35 // pred_check
              _
            $region38: #{tpu_custom_call.1} parent=35 // pred_check_branch
              %206 = sbr.rel (0) target = $region40
            $region39: #{tpu_custom_call.1} parent=35 // pred_region
              // Predicated region
              $region52: #{tpu_custom_call.1} parent=39 // pred_check
                _
              $region53: #{tpu_custom_call.1} parent=39 // pred_check_branch
                %223 = sbr.rel (0) target = $region55
              $region54: #{tpu_custom_call.1} parent=39 // pred_region
                loop: start=0, step=1, limit=1
                $region56: #{tpu_custom_call.1} parent=54 // loop_pre_header
                  _
                $region57: #{tpu_custom_call.1} parent=54 // loop_header
                  %s225 = sphi 0, %s229
                  %p226 = scmp.ge.s32.totalorder %s225, 1
                  %s230 = sphi %s195, %s195
                  %s231 = sphi %s202, %s202
                $region58: #{tpu_custom_call.1} parent=54 // loop_header_branch
                  %228 = sbr.rel (%p226) target = $region62
                $region59: #{tpu_custom_call.1} parent=54 // loop_body
                  %v232 = vld [vmem:[%s230] sm:$0xff]
                  %233 = vst [vmem:[%s231] sm:$0xff] %v232
                  %v234 = vld [vmem:[%s230 + $0x8] sm:$0xff]
                  %235 = vst [vmem:[%s231 + $0x10] sm:$0xff] %v234
                $region60: #{tpu_custom_call.1} parent=54 // loop_footer
                  %s229 = sadd.s32 1, %s225
                $region61: #{tpu_custom_call.1} parent=54 // loop_footer_branch
                  %224 = sbr.rel target = $region57
                $region62: #{tpu_custom_call.1} parent=54 // loop_exit
                  _
              $region55: #{tpu_custom_call.1} parent=39 // pred_fallthru
                _
              // Predicated region
              $region63: #{tpu_custom_call.1} parent=39 // pred_check
                _
              $region64: #{tpu_custom_call.1} parent=39 // pred_check_branch
                %237 = sbr.rel target = $region66
              $region65: #{tpu_custom_call.1} parent=39 // pred_region
                _
              $region66: #{tpu_custom_call.1} parent=39 // pred_fallthru
                _
            $region40: #{tpu_custom_call.1} parent=35 // pred_fallthru
              _
            // Predicated region
            $region41: #{tpu_custom_call.1} parent=35 // pred_check
              _
            $region42: #{tpu_custom_call.1} parent=35 // pred_check_branch
              %208 = sbr.rel target = $region44
            $region43: #{tpu_custom_call.1} parent=35 // pred_region
              loop: start=0, step=1, limit=1
              $region45: #{tpu_custom_call.1} parent=43 // loop_pre_header
                _
              $region46: #{tpu_custom_call.1} parent=43 // loop_header
                %s211 = sphi 0, %s215
                %p212 = scmp.ge.s32.totalorder %s211, 1
                %s216 = sphi %s195, %s195
                %s217 = sphi %s202, %s202
              $region47: #{tpu_custom_call.1} parent=43 // loop_header_branch
                %214 = sbr.rel (%p212) target = $region51
              $region48: #{tpu_custom_call.1} parent=43 // loop_body
                %v218 = vld [vmem:[%s216] sm:$0xff]
                %219 = vst [vmem:[%s217] sm:$0xff] %v218
                %v220 = vld [vmem:[%s216 + $0x8] sm:$0xff]
                %221 = vst [vmem:[%s217 + $0x10] sm:$0xff] %v220
              $region49: #{tpu_custom_call.1} parent=43 // loop_footer
                %s215 = sadd.s32 1, %s211
              $region50: #{tpu_custom_call.1} parent=43 // loop_footer_branch
                %210 = sbr.rel target = $region46
              $region51: #{tpu_custom_call.1} parent=43 // loop_exit
                _
            $region44: #{tpu_custom_call.1} parent=35 // pred_fallthru
              _
          $region36: #{tpu_custom_call.1} parent=31 // pred_fallthru
            _
          %238 = vnop
        $region32: #{tpu_custom_call.1} parent=27 // pred_fallthru
          _
      $region28: #{tpu_custom_call.1} parent=5 // pred_fallthru
        _
      %p239 = scmp.le.s32.totalorder 2, %s8
      // Predicated region
      $region67: #{tpu_custom_call.1} parent=5 // pred_check
        %p240 = pneg %p239
      $region68: #{tpu_custom_call.1} parent=5 // pred_check_branch
        %242 = sbr.rel (%p240) target = $region70
      $region69: #{tpu_custom_call.1} parent=5 // pred_region
        %s243 = ssub.s32 %s8, 2
        // Predicated region
        $region71: #{tpu_custom_call.1} parent=69 // pred_check
          %p244 = pneg %p105
        $region72: #{tpu_custom_call.1} parent=69 // pred_check_branch
          %246 = sbr.rel (%p244) target = $region74
        $region73: #{tpu_custom_call.1} parent=69 // pred_region
          %s247 = sand.u32 %s90, 1
          %s248 = sand.u32 %s90, 1
          %s249 = smul.addr %s248, 16
          %s250 = scalar_lea.vmem [#allocation2], %s249
        $region74: #{tpu_custom_call.1} parent=69 // pred_fallthru
          _
      $region70: #{tpu_custom_call.1} parent=5 // pred_fallthru
        _
    $region6: #{tpu_custom_call.1} parent=1 // loop_footer
      %s12 = sadd.s32 1, %s8
    $region7: #{tpu_custom_call.1} parent=1 // loop_footer_branch
      %7 = sbr.rel target = $region3
    $region8: #{tpu_custom_call.1} parent=1 // loop_exit
      _

</llo_original>
